<compile_context>
chip_gen: v7x
topology: tpu7x:2x2x1
jax: 0.10.0
libtpu: 0.0.40
codegen_flags: <defaults>
</compile_context>

<pallas_src>
import jax
import jax.numpy as jnp
from jax import lax
from jax.experimental import pallas as pl
from jax.experimental.pallas import tpu as pltpu


def _conv2d_mm_kernel(x_ref, w_ref, b_ref, o_ref):
    # x_ref : (TILE_M, KIN)    im2col'd activation rows (KIN = KH*W*Cin)
    # w_ref : (KIN, OW*OC)     banded weight, same block every step (resident)
    # b_ref : (1, OW*OC)       f32 bias broadcast along OW
    # o_ref : (TILE_M, OW*OC)  lane-dense output tile
    acc = jnp.dot(x_ref[...], w_ref[...], preferred_element_type=jnp.float32)
    acc = acc + b_ref[...].astype(jnp.float32)        # single VPU epilogue pass
    o_ref[...] = acc.astype(o_ref.dtype)


def _pick_tile_m(m_total, target=256):
    """Largest multiple-of-8 divisor of m_total that is <= target while leaving
    >= 2 grid programs (keeps both v7x TensorCores fed); else the full extent."""
    best = None
    t = 8
    while t <= min(m_total, target):
        if m_total % t == 0 and m_total // t >= 2:
            best = t
        t += 8
    return best if best is not None else m_total


def my_conv2d(x_nchw, weight_oihw, bias, stride=1, padding=1,
              compute_dtype=jnp.bfloat16):
    """Pallas TPU equivalent of F.conv2d(x, weight, bias, stride, padding)."""
    N, Cin, H, W = x_nchw.shape
    OC, _, KH, KW = weight_oihw.shape
    sh = sw = int(stride)
    ph = pw = int(padding)

    OH = (H + 2 * ph - KH) // sh + 1
    OW = (W + 2 * pw - KW) // sw + 1
    WCIN = W * Cin
    OWOC = OW * OC
    KIN = KH * WCIN

    # ---- layout glue (out of the hot loop) -------------------------------
    # NCHW -> (N, Hp, W*Cin), pad H only; W padding is folded into the weight.
    x = jnp.transpose(x_nchw, (0, 2, 3, 1)).reshape(N, H, WCIN)
    x = jnp.pad(x, ((0, 0), (ph, ph), (0, 0)))
    # im2col along H: fold the KH taps into the contraction dimension.
    taps = [x[:, kh:kh + (OH - 1) * sh + 1:sh, :] for kh in range(KH)]
    x_cols = jnp.stack(taps, axis=2).reshape(N * OH, KIN).astype(compute_dtype)

    # Banded weight: Wb[kh, w*Cin + c, ow*OC + oc] = sum_kw W[oc,c,kh,kw]
    #                * [w == ow*sw + kw - pw]  (out-of-range w == zero pad).
    w_hwio = jnp.transpose(weight_oihw, (2, 3, 1, 0))          # (KH, KW, Cin, OC)
    kw_i = jnp.arange(KW)[:, None, None]
    w_i = jnp.arange(W)[None, :, None]
    ow_i = jnp.arange(OW)[None, None, :]
    sel = (w_i == ow_i * sw + kw_i - pw).astype(w_hwio.dtype)  # (KW, W, OW)
    w_band = jnp.einsum('xwq,hxco->hwcqo', sel, w_hwio)        # (KH, W, Cin, OW, OC)
    w_flat = w_band.reshape(KIN, OWOC).astype(compute_dtype)

    b_packed = jnp.tile(bias.astype(jnp.float32), OW).reshape(1, OWOC)

    # ---- tiling -----------------------------------------------------------
    m_total = N * OH                       # batch folded into the matmul M dim
    tile_m = _pick_tile_m(m_total)
    grid = (m_total // tile_m,)

    out_dtype = x_nchw.dtype
    itemsize_c = jnp.dtype(compute_dtype).itemsize
    itemsize_o = jnp.dtype(out_dtype).itemsize

    # MXU flops actually issued with the banded weight (not ideal conv flops).
    flops = 2 * m_total * KIN * OWOC
    bytes_accessed = int(x_cols.size * itemsize_c + w_flat.size * itemsize_c
                         + b_packed.size * 4 + m_total * OWOC * itemsize_o)

    # VMEM budget: double-buffered x/out tiles + resident weight + bias, with
    # headroom; capped at 48 MiB so the same tiling is safe on v7x (64 MiB).
    vmem_needed = (2 * tile_m * KIN * itemsize_c
                   + 2 * KIN * OWOC * itemsize_c
                   + 2 * OWOC * 4
                   + 2 * tile_m * OWOC * itemsize_o)
    vmem_limit = int(min(max(4 * vmem_needed, 16 * 1024 * 1024),
                         48 * 1024 * 1024))

    out_flat = pl.pallas_call(
        _conv2d_mm_kernel,
        out_shape=jax.ShapeDtypeStruct((m_total, OWOC), out_dtype),
        grid=grid,
        in_specs=[
            pl.BlockSpec((tile_m, KIN), lambda i: (i, 0)),   # activation rows
            pl.BlockSpec((KIN, OWOC), lambda i: (0, 0)),     # banded weight
            pl.BlockSpec((1, OWOC), lambda i: (0, 0)),       # bias
        ],
        out_specs=pl.BlockSpec((tile_m, OWOC), lambda i: (i, 0)),
        compiler_params=pltpu.CompilerParams(
            dimension_semantics=("parallel",),
            vmem_limit_bytes=vmem_limit,
        ),
        cost_estimate=pl.CostEstimate(
            flops=flops, transcendentals=0, bytes_accessed=bytes_accessed),
    )(x_cols, w_flat, b_packed)

    out = out_flat.reshape(N, OH, OW, OC)
    return jnp.transpose(out, (0, 3, 1, 2))                   # back to NCHW


if __name__ == "__main__":
    # Small shapes consistent with the module: NCHW input, k=3, stride=1, pad=1.
    N, CIN, H, W = 2, 4, 16, 16
    COUT, K = 8, 3

    key = jax.random.PRNGKey(0)
    kx, kw, kb = jax.random.split(key, 3)
    x = jax.random.normal(kx, (N, CIN, H, W), dtype=jnp.float32)
    # Module's __init__ uses zeros; deterministic random params exercise numerics.
    weight = jax.random.normal(kw, (COUT, CIN, K, K), dtype=jnp.float32) * 0.1
    bias = jax.random.normal(kb, (COUT,), dtype=jnp.float32) * 0.1

    # bf16 MXU-operand path (default for v5e/v6e/v7x; f32 accumulation).
    out_bf16 = jax.block_until_ready(
        my_conv2d(x, weight, bias, stride=1, padding=1,
                  compute_dtype=jnp.bfloat16))
    # all-f32 operand path (only if exact-f32 conv numerics are required).
    out_f32 = jax.block_until_ready(
        my_conv2d(x, weight, bias, stride=1, padding=1,
                  compute_dtype=jnp.float32))

    def ref_conv(xr, wr):
        return lax.conv_general_dilated(
            xr, wr, window_strides=(1, 1), padding=((1, 1), (1, 1)),
            dimension_numbers=("NCHW", "OIHW", "NCHW"),
            precision=lax.Precision.HIGHEST,
        ) + bias.reshape(1, COUT, 1, 1)

    ref_f32 = ref_conv(x, weight)
    ref_q = ref_conv(x.astype(jnp.bfloat16).astype(jnp.float32),
                     weight.astype(jnp.bfloat16).astype(jnp.float32))

    assert out_f32.shape == (N, COUT, H, W), out_f32.shape
    assert out_bf16.shape == (N, COUT, H, W), out_bf16.shape
    assert jnp.allclose(out_f32, ref_f32, atol=2e-3, rtol=2e-3), float(
        jnp.max(jnp.abs(out_f32 - ref_f32)))
    assert jnp.allclose(out_bf16, ref_q, atol=2e-3, rtol=2e-3), float(
        jnp.max(jnp.abs(out_bf16 - ref_q)))

    print("KERNEL_OK")
</pallas_src>

<mosaic_0001>
module attributes {stable_mosaic.version = 11 : i64} {
  func.func @_conv2d_mm_kernel(%arg0: i32, %arg1: memref<16x192xbf16, #tpu.memory_space<vmem>>, %arg2: memref<192x128xbf16, #tpu.memory_space<vmem>>, %arg3: memref<1x128xf32, #tpu.memory_space<vmem>>, %arg4: memref<16x128xf32, #tpu.memory_space<vmem>>) attributes {dimension_semantics = [#tpu.dimension_semantics<parallel>], iteration_bounds = array<i64: 2>, scalar_prefetch = 0 : i64, scratch_operands = 0 : i64, tpu.core_type = #tpu.core_type<tc>, window_params = [{transform_indices = @transform_0, window_bounds = array<i64: 16, 192>}, {pipeline_mode = #tpu.pipeline_mode<synchronous>, transform_indices = @transform_1, window_bounds = array<i64: 192, 128>}, {pipeline_mode = #tpu.pipeline_mode<synchronous>, transform_indices = @transform_2, window_bounds = array<i64: 1, 128>}, {transform_indices = @transform_3, window_bounds = array<i64: 16, 128>}]} {
    %c0 = arith.constant 0 : index
    %c0_0 = arith.constant 0 : index
    %0 = vector.load %arg1[%c0, %c0_0] : memref<16x192xbf16, #tpu.memory_space<vmem>>, vector<16x192xbf16>
    %c0_1 = arith.constant 0 : index
    %c0_2 = arith.constant 0 : index
    %1 = vector.load %arg2[%c0_1, %c0_2] : memref<192x128xbf16, #tpu.memory_space<vmem>>, vector<192x128xbf16>
    %cst = arith.constant dense<0.000000e+00> : vector<16x128xf32>
    %2 = tpu.matmul %0, %1, %cst {dimension_numbers = #tpu.dot_dimension_numbers<[1], [0], [0], [1], [0, 0, 1, 1], [], []>} : vector<16x192xbf16>, vector<192x128xbf16>, vector<16x128xf32> -> vector<16x128xf32>
    %c0_3 = arith.constant 0 : index
    %c0_4 = arith.constant 0 : index
    %3 = vector.load %arg3[%c0_3, %c0_4] : memref<1x128xf32, #tpu.memory_space<vmem>>, vector<1x128xf32>
    %4 = vector.broadcast %3 : vector<1x128xf32> to vector<16x128xf32>
    %5 = arith.addf %2, %4 : vector<16x128xf32>
    %c0_5 = arith.constant 0 : index
    %c0_6 = arith.constant 0 : index
    %6 = vector.load %arg4[%c0_5, %c0_6] : memref<16x128xf32, #tpu.memory_space<vmem>>, vector<16x128xf32>
    tpu.vector_store %arg4[%c0_5, %c0_6], %5 {strides = array<i32>} : memref<16x128xf32, #tpu.memory_space<vmem>>, vector<16x128xf32>,
    return
  }
  func.func @transform_0(%arg0: i32) -> (i32, i32) {
    %c0_i32 = arith.constant 0 : i32
    %c0_i32_0 = arith.constant 0 : i32
    return %arg0, %c0_i32 : i32, i32
  }
  func.func @transform_1(%arg0: i32) -> (i32, i32) {
    %c0_i32 = arith.constant 0 : i32
    %c0_i32_0 = arith.constant 0 : i32
    %c0_i32_1 = arith.constant 0 : i32
    return %c0_i32, %c0_i32_0 : i32, i32
  }
  func.func @transform_2(%arg0: i32) -> (i32, i32) {
    %c0_i32 = arith.constant 0 : i32
    %c0_i32_0 = arith.constant 0 : i32
    %c0_i32_1 = arith.constant 0 : i32
    return %c0_i32, %c0_i32_0 : i32, i32
  }
  func.func @transform_3(%arg0: i32) -> (i32, i32) {
    %c0_i32 = arith.constant 0 : i32
    %c0_i32_0 = arith.constant 0 : i32
    return %arg0, %c0_i32 : i32, i32
  }
}

</mosaic_0001>

<llo_original>
// kernel: tpu_custom_call.1
$region0: #{tpu_custom_call.1}
  #allocation0 [shape = 'u32[]', space=smem, size = 0x4, offset = 0x4, fixed_abs, tag = 'smem constant byte address 0x4 - core index']
  #allocation1 [shape = 'u32[144,128]{1,0:T(1,128)}', space=vmem, size = 0x12000, scoped, tag = 'internal scratch']
  %s0 = inlined_call_operand.hbm [shape: bf16[32,192], index: 0, kind: input, shape index: {}]
  %s1 = inlined_call_operand.hbm [shape: bf16[192,128], index: 1, kind: input, shape index: {}]
  %s2 = inlined_call_operand.vmem [shape: f32[1,128], index: 2, kind: input, shape index: {}]
  %s3 = inlined_call_operand.hbm [shape: f32[32,128], index: 3, kind: output, shape index: {}]
  %s4 = sld [smem:[#allocation0]]
  $region53: #{tpu_custom_call.1} parent=0
    _
  %s6 = ssub.s32 1, %s4
  %s7 = scalar_select 0, %s6, %s4
  $region1: #{tpu_custom_call.1} parent=0
    #allocation2 [shape = 'u8[16384]{0}', space=vmem, size = 0x4000, scoped, tag = 'input window, operand 0']
    #allocation3 [shape = 's32[2]{0}', space=sflag, size = 0x8, scoped, tag = 'scoped memory for tpu_custom_call.1']
    #allocation4 [shape = 's32[2]{0}', space=sflag, size = 0x8, scoped, tag = 'scoped memory for tpu_custom_call.1']
    #allocation5 [shape = 'u8[49152]{0}', space=vmem, size = 0xc000, scoped, tag = 'input window, operand 1, single buffered']
    #allocation6 [shape = 's32[1]{0}', space=sflag, size = 0x4, scoped, tag = 'scoped memory for tpu_custom_call.1']
    #allocation7 [shape = 'u8[16384]{0}', space=vmem, size = 0x4000, scoped, tag = 'output window, operand 0']
    %8 = vsyncpa [#allocation3], 0
    %s9 = scalar_lea.sflag [#allocation3], 1
    %10 = vsyncpa %s9, 0
    %11 = vsyncpa [#allocation6], 0
    %12 = vsyncpa [#allocation4], 0
    %s13 = scalar_lea.sflag [#allocation4], 1
    %14 = vsyncpa %s13, 0
    loop: start=0, step=1, limit=4
    $region2: #{tpu_custom_call.1} parent=1 // loop_pre_header
      _
    $region3: #{tpu_custom_call.1} parent=1 // loop_header
      %s16 = sphi 0, %s20
      %p17 = scmp.ge.s32.totalorder %s16, 4
      %s26 = sphi 0, %s28
      %s29 = sphi 0, %s26
      %s30 = sphi 0, %s29
      %s46 = sphi 0, %s30
      %s50 = sphi 0, %s50
      %s52 = sphi 0, %s50
      %s53 = sphi 0, %s52
      %s67 = sphi 0, %s53
      %s71 = sphi 0, %s71
      %s73 = sphi 0, %s71
      %s74 = sphi 0, %s73
      %s88 = sphi 0, %s74
      %s94 = sphi 0, %s96
      %s97 = sphi 0, %s94
      %s98 = sphi 0, %s97
      %s114 = sphi 0, %s98
    $region4: #{tpu_custom_call.1} parent=1 // loop_header_branch
      %19 = sbr.rel (%p17) target = $region8
    $region5: #{tpu_custom_call.1} parent=1 // loop_body
      %s21 = ssub.s32 %s16, 1
      %s22 = ssub.s32 %s16, 2
      %s23 = sadd.s32 %s16, 1
      %s24 = ssub.s32 %s16, %s23
      %p25 = scmp.eq.s32.totalorder %s24, 0
      %s27 = sadd.s32 %s26, 1
      %s28 = scalar_select %p25, %s26, %s27
      %p31 = pneg %p25
      %p32 = scmp.eq.s32.totalorder %s16, 1
      %p33 = por %p31, %p32
      %p34 = scmp.ne.s32.totalorder %s26, %s29
      %p35 = scmp.eq.s32.totalorder %s16, 0
      %p36 = por %p34, %p35
      %p37 = scmp.ne.s32.totalorder %s26, %s29
      %p38 = scmp.eq.s32.totalorder %s21, 1
      %p39 = por %p37, %p38
      %p40 = scmp.ne.s32.totalorder %s29, %s30
      %p41 = scmp.eq.s32.totalorder %s21, 0
      %p42 = por %p40, %p41
      %p43 = scmp.ne.s32.totalorder %s29, %s30
      %p44 = scmp.eq.s32.totalorder %s22, 1
      %p45 = por %p43, %p44
      %p47 = scmp.ne.s32.totalorder %s30, %s46
      %p48 = scmp.eq.s32.totalorder %s22, 0
      %p49 = por %p47, %p48
      %s51 = sadd.s32 %s50, 1
      %p54 = scmp.eq.s32.totalorder %s16, 1
      %p55 = scmp.ne.s32.totalorder %s50, %s52
      %p56 = scmp.eq.s32.totalorder %s16, 0
      %p57 = por %p55, %p56
      %p58 = scmp.ne.s32.totalorder %s50, %s52
      %p59 = scmp.eq.s32.totalorder %s21, 1
      %p60 = por %p58, %p59
      %p61 = scmp.ne.s32.totalorder %s52, %s53
      %p62 = scmp.eq.s32.totalorder %s21, 0
      %p63 = por %p61, %p62
      %p64 = scmp.ne.s32.totalorder %s52, %s53
      %p65 = scmp.eq.s32.totalorder %s22, 1
      %p66 = por %p64, %p65
      %p68 = scmp.ne.s32.totalorder %s53, %s67
      %p69 = scmp.eq.s32.totalorder %s22, 0
      %p70 = por %p68, %p69
      %s72 = sadd.s32 %s71, 1
      %p75 = scmp.eq.s32.totalorder %s16, 1
      %p76 = scmp.ne.s32.totalorder %s71, %s73
      %p77 = scmp.eq.s32.totalorder %s16, 0
      %p78 = por %p76, %p77
      %p79 = scmp.ne.s32.totalorder %s71, %s73
      %p80 = scmp.eq.s32.totalorder %s21, 1
      %p81 = por %p79, %p80
      %p82 = scmp.ne.s32.totalorder %s73, %s74
      %p83 = scmp.eq.s32.totalorder %s21, 0
      %p84 = por %p82, %p83
      %p85 = scmp.ne.s32.totalorder %s73, %s74
      %p86 = scmp.eq.s32.totalorder %s22, 1
      %p87 = por %p85, %p86
      %p89 = scmp.ne.s32.totalorder %s74, %s88
      %p90 = scmp.eq.s32.totalorder %s22, 0
      %p91 = por %p89, %p90
      %s92 = ssub.s32 %s16, %s23
      %p93 = scmp.eq.s32.totalorder %s92, 0
      %s95 = sadd.s32 %s94, 1
      %s96 = scalar_select %p93, %s94, %s95
      %p99 = pneg %p93
      %p100 = scmp.eq.s32.totalorder %s16, 1
      %p101 = por %p99, %p100
      %p102 = scmp.ne.s32.totalorder %s94, %s97
      %p103 = scmp.eq.s32.totalorder %s16, 0
      %p104 = por %p102, %p103
      %p105 = scmp.ne.s32.totalorder %s94, %s97
      %p106 = scmp.eq.s32.totalorder %s21, 1
      %p107 = por %p105, %p106
      %p108 = scmp.ne.s32.totalorder %s97, %s98
      %p109 = scmp.eq.s32.totalorder %s21, 0
      %p110 = por %p108, %p109
      %p111 = scmp.ne.s32.totalorder %s97, %s98
      %p112 = scmp.eq.s32.totalorder %s22, 1
      %p113 = por %p111, %p112
      %p115 = scmp.ne.s32.totalorder %s98, %s114
      %p116 = scmp.eq.s32.totalorder %s22, 0
      %p117 = por %p115, %p116
      %p118 = scmp.le.s32.totalorder 1, %s16
      %p119 = scmp.lt.s32.totalorder %s16, 3
      %p120 = pnand %p118, %p119
      %p121 = pneg %p120
      // Predicated region
      $region9: #{tpu_custom_call.1} parent=5 // pred_check
        _
      $region10: #{tpu_custom_call.1} parent=5 // pred_check_branch
        %123 = sbr.rel (%p120) target = $region12
      $region11: #{tpu_custom_call.1} parent=5 // pred_region
        %s124 = ssub.s32 %s16, 1
        // Predicated region
        $region13: #{tpu_custom_call.1} parent=11 // pred_check
          %p125 = pneg %p63
        $region14: #{tpu_custom_call.1} parent=11 // pred_check_branch
          %127 = sbr.rel (%p125) target = $region16
        $region15: #{tpu_custom_call.1} parent=11 // pred_region
          %s129 = ssub.s32 1536, 1536
          %130 = vsyncadd [#allocation6], %s129
          %s131 = sshll.u32 [#allocation5], 4
          %s132 = int_to_ptr.vmem [resolvable:$true] %s131
          %137 = dma.hbm_to_vmem [thread:$0]  %s1, 1536, %s132, [#allocation6], 64, 64, 4
        $region16: #{tpu_custom_call.1} parent=11 // pred_fallthru
          _
        // Predicated region
        $region17: #{tpu_custom_call.1} parent=11 // pred_check
          %p138 = pneg %p84
        $region18: #{tpu_custom_call.1} parent=11 // pred_check_branch
          %140 = sbr.rel (%p138) target = $region20
        $region19: #{tpu_custom_call.1} parent=11 // pred_region
          _
        $region20: #{tpu_custom_call.1} parent=11 // pred_fallthru
          _
      $region12: #{tpu_custom_call.1} parent=5 // pred_fallthru
        _
      %p141 = scmp.lt.s32.totalorder %s16, 2
      // Predicated region
      $region21: #{tpu_custom_call.1} parent=5 // pred_check
        %p142 = pneg %p141
      $region22: #{tpu_custom_call.1} parent=5 // pred_check_branch
        %144 = sbr.rel (%p142) target = $region24
      $region23: #{tpu_custom_call.1} parent=5 // pred_region
        // Predicated region
        $region25: #{tpu_custom_call.1} parent=23 // pred_check
          %p145 = pneg %p36
        $region26: #{tpu_custom_call.1} parent=23 // pred_check_branch
          %147 = sbr.rel (%p145) target = $region28
        $region27: #{tpu_custom_call.1} parent=23 // pred_region
          %s148 = sand.u32 %s26, 1
          %s149 = scalar_lea.sflag [#allocation3], %s148
          %s150 = sand.u32 %s26, 1
          %s151 = smul.addr %s150, 16
          %s152 = scalar_lea.vmem [#allocation2], %s151
          %s153 = smul.u32 2, %s16
          %s155 = ssub.s32 256, 256
          %156 = vsyncadd %s149, %s155
          %s157 = smul.addr %s153, 2
          %s158 = smul.addr %s157, 64
          %s159 = scalar_lea.hbm %s0, %s158
          %s160 = sshll.u32 %s152, 4
          %s161 = int_to_ptr.vmem [resolvable:$true] %s160
          %166 = dma.hbm_to_vmem [thread:$0]  %s159, 256, %s161, %s149, 128, 128, 8
        $region28: #{tpu_custom_call.1} parent=23 // pred_fallthru
          _
      $region24: #{tpu_custom_call.1} parent=5 // pred_fallthru
        _
      %p167 = scmp.le.s32.totalorder 1, %s16
      %p168 = scmp.lt.s32.totalorder %s16, 3
      %p169 = pnand %p167, %p168
      %p170 = pneg %p169
      // Predicated region
      $region29: #{tpu_custom_call.1} parent=5 // pred_check
        _
      $region30: #{tpu_custom_call.1} parent=5 // pred_check_branch
        %172 = sbr.rel (%p169) target = $region32
      $region31: #{tpu_custom_call.1} parent=5 // pred_region
        %s173 = ssub.s32 %s16, 1
        %s174 = sand.u32 %s29, 1
        %s175 = scalar_lea.sflag [#allocation3], %s174
        %s176 = sand.u32 %s29, 1
        %s177 = smul.addr %s176, 16
        %s178 = scalar_lea.vmem [#allocation2], %s177
        // Predicated region
        $region33: #{tpu_custom_call.1} parent=31 // pred_check
          %p179 = pneg %p42
        $region34: #{tpu_custom_call.1} parent=31 // pred_check_branch
          %181 = sbr.rel (%p179) target = $region36
        $region35: #{tpu_custom_call.1} parent=31 // pred_region
          %182 = dma.done %s175, 256
        $region36: #{tpu_custom_call.1} parent=31 // pred_fallthru
          _
        // Predicated region
        $region37: #{tpu_custom_call.1} parent=31 // pred_check
          %p183 = pneg %p63
        $region38: #{tpu_custom_call.1} parent=31 // pred_check_branch
          %185 = sbr.rel (%p183) target = $region40
        $region39: #{tpu_custom_call.1} parent=31 // pred_region
          %186 = dma.done [#allocation6], 1536
        $region40: #{tpu_custom_call.1} parent=31 // pred_fallthru
          _
        %s187 = sand.u32 %s29, 1
        %s188 = scalar_lea.sflag [#allocation3], %s187
        %s189 = sand.u32 %s29, 1
        %s190 = smul.addr %s189, 16
        %s191 = scalar_lea.vmem [#allocation2], %s190
        %p192 = pneg %p42
        %p193 = pneg %p39
        %p194 = pneg %p63
        %p195 = pneg %p60
        %p196 = pneg %p84
        %p197 = pneg %p81
        %p198 = pneg %p110
        %p199 = pneg %p107
        %s200 = sand.u32 %s97, 1
        %s201 = scalar_lea.sflag [#allocation4], %s200
        %s202 = sand.u32 %s97, 1
        %s203 = smul.addr %s202, 16
        %s204 = scalar_lea.vmem [#allocation7], %s203
        %s205 = smul.u32 2, %s21
        %s206 = smul.u32 2, %s21
        %v208 = vld [vmem:[%s178] sm:$0xff]
        %v209 = vld [vmem:[%s178 + $0x8] sm:$0xff]
        %v210 = vld [vmem:[#allocation5] sm:$0xf]
        %v211 = vld [vmem:[#allocation5 + $0x4] sm:$0xf]
        %v212 = vld [vmem:[#allocation5 + $0x8] sm:$0xf]
        %v213 = vld [vmem:[#allocation5 + $0xc] sm:$0xf]
        %v214 = vld [vmem:[#allocation5 + $0x10] sm:$0xf]
        %v215 = vld [vmem:[#allocation5 + $0x14] sm:$0xf]
        %v216 = vld [vmem:[#allocation5 + $0x18] sm:$0xf]
        %v217 = vld [vmem:[#allocation5 + $0x1c] sm:$0xf]
        %v218 = vld [vmem:[#allocation5 + $0x20] sm:$0xf]
        %v219 = vld [vmem:[#allocation5 + $0x24] sm:$0xf]
        %v220 = vld [vmem:[#allocation5 + $0x28] sm:$0xf]
        %v221 = vld [vmem:[#allocation5 + $0x2c] sm:$0xf]
        %v222 = vld [vmem:[#allocation5 + $0x30] sm:$0xf]
        %v223 = vld [vmem:[#allocation5 + $0x34] sm:$0xf]
        %v224 = vld [vmem:[#allocation5 + $0x38] sm:$0xf]
        %v225 = vld [vmem:[#allocation5 + $0x3c] sm:$0xf]
        %v226 = vld [vmem:[#allocation5 + $0x40] sm:$0xf]
        %v227 = vld [vmem:[#allocation5 + $0x44] sm:$0xf]
        %v228 = vld [vmem:[#allocation5 + $0x48] sm:$0xf]
        %v229 = vld [vmem:[#allocation5 + $0x4c] sm:$0xf]
        %v230 = vld [vmem:[#allocation5 + $0x50] sm:$0xf]
        %v231 = vld [vmem:[#allocation5 + $0x54] sm:$0xf]
        %v232 = vld [vmem:[#allocation5 + $0x58] sm:$0xf]
        %v233 = vld [vmem:[#allocation5 + $0x5c] sm:$0xf]
        %v234 = vld [vmem:[%s2] sm:$0x1]
        %v236 = vlaneseq
        %v237 = vshrl.u32 %v236, 7
        %v238 = vsub.s32 0, %v237
        %v239 = vrot.slane %v234, %v238
        %v243 = vunpack.c.l.b16 %v208
        %v244 = vunpack.c.h.b16 %v208
        %v245 = vunpack.c.l.b16 %v209
        %v246 = vunpack.c.h.b16 %v209
        %v247 = vpack.c.b16 %v245, %v243
        %v248 = vpack.c.b16 %v246, %v244
        %v274 = vunpack.c.l.b16 %v210
        %v275 = vunpack.c.l.b16 %v211
        %v276 = vunpack.c.l.b16 %v212
        %v277 = vunpack.c.l.b16 %v213
        %v278 = vunpack.c.l.b16 %v214
        %v279 = vunpack.c.l.b16 %v215
        %v280 = vunpack.c.l.b16 %v216
        %v281 = vunpack.c.l.b16 %v217
        %v282 = vunpack.c.l.b16 %v218
        %v283 = vunpack.c.l.b16 %v219
        %v284 = vunpack.c.l.b16 %v220
        %v285 = vunpack.c.l.b16 %v221
        %v286 = vunpack.c.l.b16 %v222
        %v287 = vunpack.c.l.b16 %v223
        %v288 = vunpack.c.l.b16 %v224
        %v289 = vunpack.c.l.b16 %v225
        %v290 = vunpack.c.l.b16 %v226
        %v291 = vunpack.c.l.b16 %v227
        %v292 = vunpack.c.l.b16 %v228
        %v293 = vunpack.c.l.b16 %v229
        %v294 = vunpack.c.l.b16 %v230
        %v295 = vunpack.c.l.b16 %v231
        %v296 = vunpack.c.l.b16 %v232
        %v297 = vunpack.c.l.b16 %v233
        %v298 = vpack.c.b16 %v275, %v274
        %v299 = vpack.c.b16 %v277, %v276
        %v300 = vpack.c.b16 %v279, %v278
        %v301 = vpack.c.b16 %v281, %v280
        %v302 = vpack.c.b16 %v283, %v282
        %v303 = vpack.c.b16 %v285, %v284
        %v304 = vpack.c.b16 %v287, %v286
        %v305 = vpack.c.b16 %v289, %v288
        %v306 = vpack.c.b16 %v291, %v290
        %v307 = vpack.c.b16 %v293, %v292
        %v308 = vpack.c.b16 %v295, %v294
        %v309 = vpack.c.b16 %v297, %v296
        %vm322 = vcmask 523264
        %v324 = vsel %vm322, %v248, 0
        %326 = vmatprep.subr.bf16.mxu0 0
        %327 = vmatpush1.bf16.msra.mxu0 %v298
        %328 = vmatprep.subr.bf16.mxu0 0
        %329 = vmatpush1.bf16.msra.mxu0 %v299
        %330 = vmatprep.subr.bf16.mxu0 0
        %331 = vmatpush1.bf16.msra.mxu0 %v300
        %332 = vmatprep.subr.bf16.mxu0 0
        %333 = vmatpush1.bf16.msra.mxu0 %v301
        %334 = vmatprep.subr.bf16.mxu0 0
        %335 = vmatpush1.bf16.msra.mxu0 %v302
        %336 = vmatprep.subr.bf16.mxu0 0
        %337 = vmatpush1.bf16.msra.mxu0 %v303
        %338 = vmatprep.subr.bf16.mxu0 0
        %339 = vmatpush1.bf16.msra.mxu0 %v304
        %340 = vmatprep.subr.bf16.mxu0 0
        %341 = vmatpush1.bf16.msra.mxu0 %v305
        %342 = vmatprep.subr.bf16.mxu0 0
        %343 = vmatpush1.bf16.msra.mxu0 %v306
        %344 = vmatprep.subr.bf16.mxu0 0
        %345 = vmatpush1.bf16.msra.mxu0 %v307
        %346 = vmatprep.subr.bf16.mxu0 0
        %347 = vmatpush1.bf16.msra.mxu0 %v308
        %348 = vmatprep.subr.bf16.mxu0 0
        %349 = vmatpush1.bf16.msra.mxu0 %v309
        %350 = vmatprep.subr.bf16.mxu0 0
        %351 = vmatpush1.bf16.msra.mxu0 0
        %352 = vmatprep.subr.bf16.mxu0 0
        %353 = vmatpush1.bf16.msra.mxu0 0
        %354 = vmatprep.subr.bf16.mxu0 0
        %355 = vmatpush1.bf16.msra.mxu0 0
        %356 = vmatprep.subr.bf16.mxu0 0
        %357 = vmatpush1.bf16.msra.mxu0 0
        %358 = vmatprep.mubr.bf16.mxu0 %v324
        %359 = vmatmul.mubr.bf16.gmra.mrb[0].mxu0 %v247
        %v360 = vpop.f32.mrb[0].mxu0
        %v361 = vadd.f32 %v239, %v360
        %v362 = vpop.f32.mrb[0].mxu0
        %v363 = vpop.f32.mrb[0].mxu0
        %v364 = vadd.f32 %v239, %v363
        %v365 = vpop.f32.mrb[0].mxu0
        %366 = vdwg.mxu0
        %367 = vst [vmem:[%s204] sm:$0xff] %v361
        %368 = vst [vmem:[%s204 + $0x8] sm:$0xff] %v364
        %s369 = sand.u32 %s97, 1
        %s370 = scalar_lea.sflag [#allocation4], %s369
        %s371 = sand.u32 %s97, 1
        %s372 = smul.addr %s371, 16
        %s373 = scalar_lea.vmem [#allocation7], %s372
        // Predicated region
        $region41: #{tpu_custom_call.1} parent=31 // pred_check
          %p374 = pneg %p107
        $region42: #{tpu_custom_call.1} parent=31 // pred_check_branch
          %376 = sbr.rel (%p374) target = $region44
        $region43: #{tpu_custom_call.1} parent=31 // pred_region
          %s377 = smul.u32 2, %s21
          %s379 = ssub.s32 256, 256
          %380 = vsyncadd %s370, %s379
          %s381 = smul.addr %s377, 128
          %s382 = scalar_lea.hbm %s3, %s381
          %s383 = sshll.u32 %s373, 4
          %s384 = int_to_ptr.vmem [resolvable:$true] %s383
          %389 = dma.vmem_to_hbm [thread:$0]  %s384, 256, %s382, %s370, 128, 128, 8
        $region44: #{tpu_custom_call.1} parent=31 // pred_fallthru
          _
      $region32: #{tpu_custom_call.1} parent=5 // pred_fallthru
        _
      %p390 = scmp.le.s32.totalorder 2, %s16
      // Predicated region
      $region45: #{tpu_custom_call.1} parent=5 // pred_check
        %p391 = pneg %p390
      $region46: #{tpu_custom_call.1} parent=5 // pred_check_branch
        %393 = sbr.rel (%p391) target = $region48
      $region47: #{tpu_custom_call.1} parent=5 // pred_region
        %s394 = ssub.s32 %s16, 2
        // Predicated region
        $region49: #{tpu_custom_call.1} parent=47 // pred_check
          %p395 = pneg %p113
        $region50: #{tpu_custom_call.1} parent=47 // pred_check_branch
          %397 = sbr.rel (%p395) target = $region52
        $region51: #{tpu_custom_call.1} parent=47 // pred_region
          %s398 = sand.u32 %s98, 1
          %s399 = scalar_lea.sflag [#allocation4], %s398
          %s400 = sand.u32 %s98, 1
          %s401 = smul.addr %s400, 16
          %s402 = scalar_lea.vmem [#allocation7], %s401
          %403 = dma.done %s399, 256
        $region52: #{tpu_custom_call.1} parent=47 // pred_fallthru
          _
      $region48: #{tpu_custom_call.1} parent=5 // pred_fallthru
        _
    $region6: #{tpu_custom_call.1} parent=1 // loop_footer
      %s20 = sadd.s32 1, %s16
    $region7: #{tpu_custom_call.1} parent=1 // loop_footer_branch
      %15 = sbr.rel target = $region3
    $region8: #{tpu_custom_call.1} parent=1 // loop_exit
      _
    %404 = vsyncpa [#allocation3], 1
    %s405 = scalar_lea.sflag [#allocation3], 1
    %406 = vsyncpa %s405, 1
    %407 = vsyncpa [#allocation6], 1
    %408 = vsyncpa [#allocation4], 1
    %s409 = scalar_lea.sflag [#allocation4], 1
    %410 = vsyncpa %s409, 1

</llo_original>
